<compile_context>
chip_gen: v5e
topology: v5e:2x2
jax: 0.10.0
libtpu: 0.0.40
codegen_flags: <defaults>
</compile_context>

<pallas_src>
import functools

import jax
import jax.numpy as jnp
from jax.experimental import pallas as pl
from jax.experimental.pallas import tpu as pltpu


# ----------------------------------------------------------------------------
# Helpers
# ----------------------------------------------------------------------------
def _int_pow(x, gamma):
    """x ** gamma, using VPU multiplies when gamma is a small integer."""
    g = float(gamma)
    if g == 0.0:
        return jnp.ones_like(x)
    if g.is_integer() and 0.0 < g <= 8.0:
        out = x
        for _ in range(int(g) - 1):
            out = out * x
        return out
    return x ** g  # non-integer gamma: fall back to pow (EUP)


def _tpu_budgets():
    """(per-step input byte budget, scoped VMEM limit) per TPU generation."""
    try:
        vmem_cap = int(pltpu.get_tpu_info().vmem_capacity_bytes)
    except Exception:
        vmem_cap = 64 << 20
    if vmem_cap >= (96 << 20):            # v5e / v6e class: 128 MiB VMEM
        return 6 << 20, 64 << 20
    return 3 << 20, 48 << 20              # v7x class: 64 MiB VMEM per core


def _pick_batch_tile(B, C, row_bytes, target_tile_bytes):
    """Rows per grid step: multiple of 8, per-step input bytes <= target."""
    tb = (target_tile_bytes // max(1, row_bytes)) // 8 * 8
    tb = max(8, min(int(tb), 8192))
    if B >= 8:
        tb = min(tb, (B // 8) * 8)
    return int(tb)


# ----------------------------------------------------------------------------
# Kernels
# ----------------------------------------------------------------------------
def _focal_multiclass_kernel(logits_ref, labels_ref, out_ref, *,
                             gamma, alpha, batch, tile_b):
    i = pl.program_id(0)
    x = logits_ref[...].astype(jnp.float32)              # (TB, C)
    lab = labels_ref[...]                                 # (TB, 1) int32

    # softmax pieces: only the exp touches the full tile.
    m = jnp.max(x, axis=1, keepdims=True)                 # (TB, 1)
    e = jnp.exp(x - m)                                     # (TB, C)
    denom = jnp.sum(e, axis=1, keepdims=True)              # (TB, 1)

    # select the labeled class without materializing a one-hot f32 temp.
    cls = jax.lax.broadcasted_iota(jnp.int32, x.shape, 1)
    e_t = jnp.sum(jnp.where(cls == lab, e, 0.0), axis=1, keepdims=True)

    # per-row quantities only from here on.
    p_t = e_t / denom                                      # (TB, 1)
    sub_pt = jnp.clip(1.0 - p_t, 1e-8, 1.0)
    focal_w = _int_pow(sub_pt, gamma)
    row_loss = -float(alpha) * focal_w * jnp.log(p_t + 1e-8)

    # ragged last tile: mask OOB rows before the reduction.
    rows = jax.lax.broadcasted_iota(jnp.int32, (tile_b, 1), 0) + i * tile_b
    partial = jnp.sum(jnp.where(rows < batch, row_loss, 0.0))

    # lane-dense partial-sum tile (wrapper reads [:, 0, 0]).
    out_ref[...] = jnp.ones(out_ref.shape, jnp.float32) * partial


def _focal_multilabel_kernel(logits_ref, labels_ref, out_ref, *,
                             gamma, batch, tile_b):
    i = pl.program_id(0)
    x = logits_ref[...].astype(jnp.float32)               # (TB, C)
    y = labels_ref[...].astype(jnp.float32)               # (TB, C)

    # Numerically stable sigmoid: one exp + one reciprocal (rational form);
    # 1 - p computed without cancellation.
    t = jnp.exp(-jnp.abs(x))                               # EUP exp
    r = 1.0 / (1.0 + t)                                    # reciprocal
    pos = x >= 0.0
    p = jnp.where(pos, r, t * r)                           # sigmoid(x)
    one_minus_p = jnp.where(pos, t * r, r)                 # 1 - sigmoid(x)

    # Exact reference epsilon semantics (clamps / +1e-8 on the log args).
    sub_pt = jnp.clip(one_minus_p, 1e-8, 1.0)
    log_p = jnp.log(p + 1e-8)                              # EUP log
    log_sub = jnp.log(sub_pt)                              # EUP log

    w_pos = _int_pow(sub_pt, gamma)
    w_neg = _int_pow(p, gamma)
    fl = -(y * w_pos * log_p + (1.0 - y) * w_neg * log_sub)   # (TB, C)

    rows = jax.lax.broadcasted_iota(jnp.int32, (tile_b, 1), 0) + i * tile_b
    partial = jnp.sum(jnp.where(rows < batch, fl, 0.0))

    out_ref[...] = jnp.ones(out_ref.shape, jnp.float32) * partial


# ----------------------------------------------------------------------------
# Wrapper (mirrors FocalLoss.forward)
# ----------------------------------------------------------------------------
def focal_loss(logits, labels, *, n_classes, gamma=0, alpha=1,
               size_average=True, multilabel=False):
    """Pallas TPU implementation of FocalLoss.forward.

    logits: (B, n_classes) float (any float dtype; upcast in-kernel)
    labels: (B,) int when multilabel=False, else (B, n_classes)
            (keep labels narrow — bool/int8/bf16 — for the multilabel path;
            the kernel upcasts, no wrapper-side cast pass is added)
    returns: scalar float32
    """
    B, C = logits.shape
    assert C == n_classes
    assert logits.shape[0] == labels.shape[0]

    target_bytes, vmem_limit = _tpu_budgets()

    if multilabel:
        row_bytes = C * (logits.dtype.itemsize + labels.dtype.itemsize)
        tb = _pick_batch_tile(B, C, row_bytes, target_bytes)
        kernel = functools.partial(
            _focal_multilabel_kernel, gamma=gamma, batch=B, tile_b=tb)
        labels_in = labels                      # native (narrow) dtype
        labels_spec = pl.BlockSpec((tb, C), lambda i: (i, 0))
        transcendentals = 3 * B * C
        label_bytes = labels.size * labels.dtype.itemsize
    else:
        row_bytes = C * logits.dtype.itemsize + 4
        tb = _pick_batch_tile(B, C, row_bytes, target_bytes)
        kernel = functools.partial(
            _focal_multiclass_kernel, gamma=gamma, alpha=alpha,
            batch=B, tile_b=tb)
        labels_in = labels.astype(jnp.int32).reshape(B, 1)
        labels_spec = pl.BlockSpec((tb, 1), lambda i: (i, 0))
        transcendentals = B * C + 2 * B
        label_bytes = B * 4

    num_tiles = int(pl.cdiv(B, tb))
    bytes_accessed = (logits.size * logits.dtype.itemsize
                      + label_bytes + num_tiles * 8 * 128 * 4)

    partials = pl.pallas_call(
        kernel,
        out_shape=jax.ShapeDtypeStruct((num_tiles, 8, 128), jnp.float32),
        grid=(num_tiles,),
        in_specs=[pl.BlockSpec((tb, C), lambda i: (i, 0)), labels_spec],
        out_specs=pl.BlockSpec((1, 8, 128), lambda i: (i, 0, 0)),
        compiler_params=pltpu.CompilerParams(
            dimension_semantics=("parallel",),
            vmem_limit_bytes=vmem_limit),
        cost_estimate=pl.CostEstimate(
            flops=10 * B * C,
            transcendentals=transcendentals,
            bytes_accessed=bytes_accessed),
    )(logits, labels_in)

    total = jnp.sum(partials[:, 0, 0])
    if size_average:
        total = total / float(B)
    return total


# ----------------------------------------------------------------------------
# Pure-JAX reference (faithful to the PyTorch formula, for self-check)
# ----------------------------------------------------------------------------
def focal_loss_ref(logits, labels, *, n_classes, gamma=0, alpha=1,
                   size_average=True, multilabel=False):
    logits = logits.astype(jnp.float32)
    if multilabel:
        labels = labels.astype(jnp.float32)
        p = jax.nn.sigmoid(logits)
        sub_pt = jnp.clip(1 - p, 1e-8, 1.0)
        fl = -(labels * sub_pt ** gamma * jnp.log(p + 1e-8)
               + (1 - labels) * p ** gamma * jnp.log(sub_pt))
    else:
        onehot = jax.nn.one_hot(labels, n_classes, dtype=jnp.float32)
        p = jax.nn.softmax(logits, axis=1)
        sub_pt = jnp.clip(1 - p, 1e-8, 1.0)
        fl = -alpha * onehot * sub_pt ** gamma * jnp.log(p + 1e-8)
    s = fl.sum()
    return s / labels.shape[0] if size_average else s


if __name__ == "__main__":
    key = jax.random.PRNGKey(0)
    B, C = 8, 32
    k1, k2, k3, k4, k5 = jax.random.split(key, 5)

    # --- multiclass path ---
    logits = jax.random.normal(k1, (B, C), dtype=jnp.float32)
    labels = jax.random.randint(k2, (B,), 0, C, dtype=jnp.int32)
    out = focal_loss(logits, labels, n_classes=C, gamma=2, alpha=0.5)
    out = jax.block_until_ready(out)
    ref = focal_loss_ref(logits, labels, n_classes=C, gamma=2, alpha=0.5)
    assert jnp.allclose(out, ref, rtol=1e-4, atol=1e-5), (out, ref)

    # --- multilabel path (narrow bf16 labels per the caller contract) ---
    ml_labels = (jax.random.uniform(k3, (B, C)) > 0.5).astype(jnp.bfloat16)
    out_ml = focal_loss(logits, ml_labels, n_classes=C, gamma=1,
                        multilabel=True)
    out_ml = jax.block_until_ready(out_ml)
    ref_ml = focal_loss_ref(logits, ml_labels, n_classes=C, gamma=1,
                            multilabel=True)
    assert jnp.allclose(out_ml, ref_ml, rtol=1e-4, atol=1e-5), (out_ml, ref_ml)

    # --- ragged batch (B not a multiple of the tile) exercises the row mask ---
    Br = 12
    logits_r = jax.random.normal(k4, (Br, C), dtype=jnp.float32)
    labels_r = jax.random.randint(k5, (Br,), 0, C, dtype=jnp.int32)
    out_r = focal_loss(logits_r, labels_r, n_classes=C, gamma=0, alpha=1,
                       size_average=False)
    out_r = jax.block_until_ready(out_r)
    ref_r = focal_loss_ref(logits_r, labels_r, n_classes=C, gamma=0, alpha=1,
                           size_average=False)
    assert jnp.allclose(out_r, ref_r, rtol=1e-4, atol=1e-5), (out_r, ref_r)

    print("KERNEL_OK")
</pallas_src>

<mosaic_0001>
module attributes {stable_mosaic.version = 11 : i64} {
  func.func @_focal_multiclass_kernel(%arg0: i32, %arg1: memref<8x32xf32, #tpu.memory_space<vmem>>, %arg2: memref<8x1xi32, #tpu.memory_space<vmem>>, %arg3: memref<1x8x128xf32, #tpu.memory_space<vmem>>) attributes {dimension_semantics = [#tpu.dimension_semantics<parallel>], iteration_bounds = array<i64: 1>, scalar_prefetch = 0 : i64, scratch_operands = 0 : i64, tpu.core_type = #tpu.core_type<tc>, window_params = [{transform_indices = @transform_0, window_bounds = array<i64: 8, 32>}, {transform_indices = @transform_1, window_bounds = array<i64: 8, 1>}, {transform_indices = @transform_2, window_bounds = array<i64: 1, 8, 128>}]} {
    %c0 = arith.constant 0 : index
    %c0_0 = arith.constant 0 : index
    %0 = vector.load %arg1[%c0, %c0_0] : memref<8x32xf32, #tpu.memory_space<vmem>>, vector<8x32xf32>
    %c0_1 = arith.constant 0 : index
    %c0_2 = arith.constant 0 : index
    %1 = vector.load %arg2[%c0_1, %c0_2] : memref<8x1xi32, #tpu.memory_space<vmem>>, vector<8x1xi32>
    %cst = arith.constant dense<0xFF800000> : vector<8xf32>
    %2 = vector.multi_reduction <maximumf>, %0, %cst [1] : vector<8x32xf32> to vector<8xf32>
    %3 = vector.shape_cast %2 : vector<8xf32> to vector<8x1xf32>
    %4 = vector.broadcast %3 : vector<8x1xf32> to vector<8x32xf32>
    %5 = arith.subf %0, %4 : vector<8x32xf32>
    %6 = math.exp %5 : vector<8x32xf32>
    %cst_3 = arith.constant dense<0.000000e+00> : vector<8xf32>
    %7 = vector.multi_reduction <add>, %6, %cst_3 [1] : vector<8x32xf32> to vector<8xf32>
    %8 = vector.shape_cast %7 : vector<8xf32> to vector<8x1xf32>
    %9 = tpu.iota {dimensions = array<i32: 1>} : vector<8x32xi32>
    %10 = vector.broadcast %1 : vector<8x1xi32> to vector<8x32xi32>
    %11 = arith.cmpi eq, %9, %10 : vector<8x32xi32>
    %cst_4 = arith.constant 0.000000e+00 : f32
    %12 = vector.broadcast %cst_4 : f32 to vector<8x32xf32>
    %13 = arith.select %11, %6, %12 : vector<8x32xi1>, vector<8x32xf32>
    %cst_5 = arith.constant dense<0.000000e+00> : vector<8xf32>
    %14 = vector.multi_reduction <add>, %13, %cst_5 [1] : vector<8x32xf32> to vector<8xf32>
    %15 = vector.shape_cast %14 : vector<8xf32> to vector<8x1xf32>
    %16 = arith.divf %15, %8 : vector<8x1xf32>
    %cst_6 = arith.constant 1.000000e+00 : f32
    %17 = vector.broadcast %cst_6 : f32 to vector<8x1xf32>
    %18 = arith.subf %17, %16 : vector<8x1xf32>
    %cst_7 = arith.constant 9.99999993E-9 : f32
    %cst_8 = arith.constant 1.000000e+00 : f32
    %19 = vector.broadcast %cst_7 : f32 to vector<8x1xf32>
    %20 = arith.maximumf %19, %18 : vector<8x1xf32>
    %21 = vector.broadcast %cst_8 : f32 to vector<8x1xf32>
    %22 = arith.minimumf %21, %20 : vector<8x1xf32>
    %23 = arith.mulf %22, %22 : vector<8x1xf32>
    %cst_9 = arith.constant -5.000000e-01 : f32
    %24 = vector.broadcast %cst_9 : f32 to vector<8x1xf32>
    %25 = arith.mulf %24, %23 : vector<8x1xf32>
    %cst_10 = arith.constant 9.99999993E-9 : f32
    %26 = vector.broadcast %cst_10 : f32 to vector<8x1xf32>
    %27 = arith.addf %16, %26 : vector<8x1xf32>
    %28 = math.log %27 : vector<8x1xf32>
    %29 = arith.mulf %25, %28 : vector<8x1xf32>
    %30 = tpu.iota {dimensions = array<i32: 0>} : vector<8x1xi32>
    %c8_i32 = arith.constant 8 : i32
    %31 = arith.muli %arg0, %c8_i32 : i32
    %32 = vector.broadcast %31 : i32 to vector<8x1xi32>
    %33 = arith.addi %30, %32 : vector<8x1xi32>
    %c8_i32_11 = arith.constant 8 : i32
    %34 = vector.broadcast %c8_i32_11 : i32 to vector<8x1xi32>
    %35 = arith.cmpi slt, %33, %34 : vector<8x1xi32>
    %cst_12 = arith.constant 0.000000e+00 : f32
    %36 = vector.broadcast %cst_12 : f32 to vector<8x1xf32>
    %37 = arith.select %35, %29, %36 : vector<8x1xi1>, vector<8x1xf32>
    %38 = vector.shape_cast %37 : vector<8x1xf32> to vector<1x8x1xf32>
    %cst_13 = arith.constant dense<0.000000e+00> : vector<1xf32>
    %39 = vector.multi_reduction <add>, %38, %cst_13 [1, 2] : vector<1x8x1xf32> to vector<1xf32>
    %40 = vector.shape_cast %39 : vector<1xf32> to vector<1x1x1xf32>
    %41 = vector.extract %40[0, 0, 0] : f32 from vector<1x1x1xf32>
    %cst_14 = arith.constant 1.000000e+00 : f32
    %42 = vector.broadcast %cst_14 : f32 to vector<1x8x128xf32>
    %43 = vector.broadcast %41 : f32 to vector<1x8x128xf32>
    %44 = arith.mulf %42, %43 : vector<1x8x128xf32>
    %c0_15 = arith.constant 0 : index
    %c0_16 = arith.constant 0 : index
    %c0_17 = arith.constant 0 : index
    %45 = vector.load %arg3[%c0_15, %c0_16, %c0_17] : memref<1x8x128xf32, #tpu.memory_space<vmem>>, vector<1x8x128xf32>
    tpu.vector_store %arg3[%c0_15, %c0_16, %c0_17], %44 {strides = array<i32>} : memref<1x8x128xf32, #tpu.memory_space<vmem>>, vector<1x8x128xf32>,
    return
  }
  func.func @transform_0(%arg0: i32) -> (i32, i32) {
    %c0_i32 = arith.constant 0 : i32
    %c0_i32_0 = arith.constant 0 : i32
    return %arg0, %c0_i32 : i32, i32
  }
  func.func @transform_1(%arg0: i32) -> (i32, i32) {
    %c0_i32 = arith.constant 0 : i32
    %c0_i32_0 = arith.constant 0 : i32
    return %arg0, %c0_i32 : i32, i32
  }
  func.func @transform_2(%arg0: i32) -> (i32, i32, i32) {
    %c0_i32 = arith.constant 0 : i32
    %c0_i32_0 = arith.constant 0 : i32
    %c0_i32_1 = arith.constant 0 : i32
    return %arg0, %c0_i32, %c0_i32_0 : i32, i32, i32
  }
}

</mosaic_0001>

<llo_original>
// kernel: tpu_custom_call.1
$region0: #{tpu_custom_call.1}
  #allocation0 [shape = 'u32[]', space=smem, size = 0x4, offset = 0x4, fixed_abs, tag = 'smem constant byte address 0x4 - core index']
  #allocation1 [shape = 'u32[72,128]{1,0:T(1,128)}', space=vmem, size = 0x9000, scoped, tag = 'internal scratch']
  %s0 = inlined_call_operand.vmem [shape: f32[8,32], index: 0, kind: input, shape index: {}]
  %s1 = inlined_call_operand.vmem [shape: s32[8,1], index: 1, kind: input, shape index: {}]
  %s2 = inlined_call_operand.hbm [shape: f32[1,8,128], index: 2, kind: output, shape index: {}]
  %s3 = sld [smem:[#allocation0]]
  $region18: #{tpu_custom_call.1} parent=0
    _
  %s5 = ssub.s32 1, %s3
  %s6 = scalar_select 0, %s5, %s3
  $region1: #{tpu_custom_call.1} parent=0
    #allocation2 [shape = 'u8[4096]{0}', space=vmem, size = 0x1000, scoped, tag = 'output window, operand 0, single buffered']
    #allocation3 [shape = 's32[1]{0}', space=sflag, size = 0x4, scoped, tag = 'scoped memory for tpu_custom_call.1']
    %7 = vsyncpa [#allocation3], 0
    // Predicated region
    $region2: #{tpu_custom_call.1} parent=1 // pred_check
      _
    $region3: #{tpu_custom_call.1} parent=1 // pred_check_branch
      %9 = sbr.rel (0) target = $region5
    $region4: #{tpu_custom_call.1} parent=1 // pred_region
      _
    $region5: #{tpu_custom_call.1} parent=1 // pred_fallthru
      _
    // Predicated region
    $region6: #{tpu_custom_call.1} parent=1 // pred_check
      _
    $region7: #{tpu_custom_call.1} parent=1 // pred_check_branch
      %11 = sbr.rel (0) target = $region9
    $region8: #{tpu_custom_call.1} parent=1 // pred_region
      _
    $region9: #{tpu_custom_call.1} parent=1 // pred_fallthru
      _
    %v12 = vld [vmem:[%s0] sm:$0xff]
    %v13 = vld [vmem:[%s1] sm:$0xff]
    %vm14 = vcmask 261120
    %v15 = vsel %vm14, %v12, -inf
    %16 = vmax.xlane.f32.xlu0 %v15
    %v17 = vpop.xlane.xlu0 %16
    %v18 = vsub.f32 %v12, %v17
    %v19 = vmul.f32 %v18, 1.442695
    %v20 = vpow.pop %v19
    %v21 = vsel %vm14, %v20, 0.0
    %22 = vadd.xlane.f32.xlu0 %v21
    %v23 = vpop.xlane.xlu0 %22
    %v24 = vlaneseq
    %v25 = vand.u32 %v24, 127
    %26 = vset.pattern.permute.xlu0 0
    %27 = vperm.xlu0 %26, %v13
    %v28 = vpop.permute.xlu0 %27
    %vm29 = vcmp.eq.s32.totalorder %v25, %v28
    %v30 = vsel %vm29, %v20, 0.0
    %v31 = vsel %vm14, %v30, 0.0
    %32 = vadd.xlane.f32.xlu0 %v31
    %v33 = vpop.xlane.xlu0 %32
    %v34 = vrcp.pop %v23
    %v35 = vmul.f32 %v23, %v34
    %v36 = vsub.f32 1.0, %v35
    %v37 = vmul.f32 %v34, %v36
    %v38 = vadd.f32 %v34, %v37
    %vm39 = vweird.f32 %v23
    %vm40 = vweird.f32 %v34
    %vm41 = vmor %vm39, %vm40
    %v42 = vsel %vm41, %v34, %v38
    %v43 = vand.u32 2147483647, %v23
    %vm44 = vcmp.eq.f32.partialorder %v43, 8.507059e+37
    %v45 = vand.u32 %v23, 2147483648
    %v46 = vor.u32 1.1754944e-38, %v45
    %v47 = vsel %vm44, %v46, %v42
    %v48 = vmul.f32 %v33, %v47
    %v49 = vsub.f32 1.0, %v48
    %v50 = vmax.f32 %v49, 1e-08
    %v51 = vmin.f32 %v50, 1.0
    %v52 = vmul.f32 %v51, %v51
    %v53 = vmul.f32 %v52, -0.5
    %v54 = vadd.f32 %v48, 1e-08
    %v55 = vlog2.pop %v54
    %v56 = vmul.f32 %v55, 0.6931472
    %v57 = vmul.f32 %v53, %v56
    %v58 = vlaneseq
    %v59 = vshrl.u32 %v58, 7
    %s60 = smul.u32 0, 8
    %v61 = vstv %s60
    %v62 = vadd.s32 %v59, %v61
    %vm63 = vcmp.lt.s32.totalorder %v62, 8
    %v64 = vsel %vm63, %v57, 0.0
    %vm65 = vcmask 7168
    %v66 = vsel %vm65, %v64, 0.0
    %67 = vadd.xlane.f32.xlu0 %v66
    %v68 = vpop.xlane.xlu0 %67
    %v69 = vrot.slane %v68, 4
    %v70 = vadd.f32 %v68, %v69
    %v71 = vrot.slane %v70, 2
    %v72 = vadd.f32 %v70, %v71
    %v73 = vrot.slane %v72, 1
    %v74 = vadd.f32 %v72, %v73
    %s75 = vtos %v74
    %v76 = vstv %s75
    %77 = vst [vmem:[#allocation2] sm:$0xff] %v76
    // Predicated region
    $region10: #{tpu_custom_call.1} parent=1 // pred_check
      _
    $region11: #{tpu_custom_call.1} parent=1 // pred_check_branch
      %79 = sbr.rel (0) target = $region13
    $region12: #{tpu_custom_call.1} parent=1 // pred_region
      %81 = vsyncadd [#allocation3], 0
      %s83 = sshll.u32 [#allocation2], 4
      %s84 = int_to_ptr.vmem [resolvable:$true] %s83
      %s85 = sshll.u32 %s2, 4
      %s86 = int_to_ptr.hbm [resolvable:$true] %s85
      %88 = dma.vmem_to_hbm [thread:$0]  %s84, 128, %s86, [#allocation3]
    $region13: #{tpu_custom_call.1} parent=1 // pred_fallthru
      _
    // Predicated region
    $region14: #{tpu_custom_call.1} parent=1 // pred_check
      _
    $region15: #{tpu_custom_call.1} parent=1 // pred_check_branch
      %90 = sbr.rel (0) target = $region17
    $region16: #{tpu_custom_call.1} parent=1 // pred_region
      %92 = dma.done [#allocation3], 128
    $region17: #{tpu_custom_call.1} parent=1 // pred_fallthru
      _
    %93 = vsyncpa [#allocation3], 1

</llo_original>
